<compile_context>
chip_gen: v7x
topology: tpu7x:2x2x1
jax: 0.10.0
libtpu: 0.0.40
codegen_flags: <defaults>
</compile_context>

<pallas_src>
import functools

import jax
import jax.numpy as jnp
from jax import lax
from jax.experimental import pallas as pl
from jax.experimental.pallas import tpu as pltpu


def _round_up(x, m):
    return (x + m - 1) // m * m


def _cdiv(a, b):
    return (a + b - 1) // b


def _padded_vmem_bytes(rows, cols, dtype):
    """VMEM footprint of a 2-D tile after (sublane, lane) layout padding."""
    itemsize = jnp.dtype(dtype).itemsize
    sublane = 8 * max(1, 4 // itemsize)          # f32 -> 8, bf16 -> 16
    return _round_up(max(rows, 1), sublane) * _round_up(max(cols, 1), 128) * itemsize


def _num_tensorcores_per_chip():
    """Best-effort detection of TensorCores per chip (perf heuristic only)."""
    try:
        kind = jax.devices()[0].device_kind.lower()
    except Exception:  # pragma: no cover - detection is purely a perf hint
        return 1
    for tag in ("v7", "7x", "v5p", "v4", "v3"):
        if tag in kind:
            return 2
    return 1


def _q_mlp_kernel(s_ref, a_ref, w1s_ref, w1a_ref, b1_ref, w2t_ref, b2_ref, o_ref):
    """Fused 2-layer MLP on one batch tile; output written transposed (O, TB).

    The batch maps onto the 128-lane axis of the output so stores are
    lane-dense (unmasked when TB is a multiple of 128).
    """
    cdt = w1s_ref.dtype
    # Cast f32 activations to the compute dtype here (not in the wrapper).
    s = s_ref[...].astype(cdt)
    a = a_ref[...].astype(cdt)

    # Layer 1: split matmul == concat([state, action]) @ W1 (concat eliminated).
    z1 = jnp.dot(s, w1s_ref[...], preferred_element_type=jnp.float32)
    z1 = z1 + jnp.dot(a, w1a_ref[...], preferred_element_type=jnp.float32)
    z1 = jnp.maximum(z1 + b1_ref[...], 0.0)                     # (TB, H) f32, VPU relu

    # Layer 2, emitted transposed: out_t[o, b] = sum_h w2t[o, h] * z1[b, h].
    # TODO(synk): if the Mosaic dump shows an explicit XLU transpose of z1 here,
    # restructure layer 1 to produce z1 already as (H, TB) so batch stays on
    # the lane axis end-to-end (low priority while HBM/overhead-bound).
    out_t = lax.dot_general(
        w2t_ref[...], z1.astype(cdt),
        dimension_numbers=(((1,), (1,)), ((), ())),
        preferred_element_type=jnp.float32)                     # (O, TB)
    o_ref[...] = out_t + b2_ref[...]                            # b2 (O, 1) broadcast


def prepare_params(weights, state_dim, *, compute_dtype=jnp.bfloat16):
    """One-time weight preprocessing; hoist this out of the per-call hot path."""
    w1 = jnp.asarray(weights["layer1_w"], jnp.float32)                  # (S+A, H)
    b1 = jnp.asarray(weights["layer1_b"], jnp.float32).reshape(1, -1)   # (1, H)
    w2 = jnp.asarray(weights["output_w"], jnp.float32)                  # (H, O)
    b2 = jnp.asarray(weights["output_b"], jnp.float32).reshape(-1, 1)   # (O, 1)
    return {
        "w1_s": w1[:state_dim].astype(compute_dtype),   # (S, H)
        "w1_a": w1[state_dim:].astype(compute_dtype),   # (A, H)
        "b1": b1,                                       # (1, H) f32
        "w2_t": w2.T.astype(compute_dtype),             # (O, H) -- no sublane pad
        "b2": b2,                                       # (O, 1) f32
    }


def sampled_q_network_apply(params, state, action, *, tile_b=2048):
    """Hot path: fused Pallas MLP over pre-prepared params."""
    state = jnp.asarray(state, jnp.float32)
    action = jnp.asarray(action, jnp.float32)
    B, S = state.shape
    A = action.shape[1]
    H = params["w1_s"].shape[1]
    O = params["w2_t"].shape[0]
    assert params["w1_s"].shape[0] == S and params["w1_a"].shape[0] == A

    # ---- batch tiling -------------------------------------------------------
    n_cores = _num_tensorcores_per_chip()
    if B <= 128:
        tile = B                                         # single full-dim block
    else:
        tile = min(_round_up(int(tile_b), 128), _round_up(B, 128))
        if n_cores >= 2 and B > 256:
            # Ensure >= 2 grid steps so both TensorCores get work on megacore
            # parts; single-TC v5e/v6e keep the big tile (fewest grid steps).
            tile = min(tile, _round_up(_cdiv(B, n_cores), 128))
    n_tiles = _cdiv(B, tile)

    # ---- VMEM budget (lane/sublane-padding aware) ---------------------------
    cdt = params["w1_s"].dtype
    vmem_needed = (
        2 * _padded_vmem_bytes(tile, S, jnp.float32)       # state tile  (x2 buffers)
        + 2 * _padded_vmem_bytes(tile, A, jnp.float32)     # action tile (x2 buffers)
        + 2 * _padded_vmem_bytes(O, tile, jnp.float32)     # output tile (x2 buffers)
        + 3 * _padded_vmem_bytes(tile, H, jnp.float32)     # z1 + elementwise temps
        + 2 * _padded_vmem_bytes(tile, max(S, A), cdt)     # in-kernel bf16 casts
        + 2 * (_padded_vmem_bytes(S, H, cdt) + _padded_vmem_bytes(A, H, cdt)
               + _padded_vmem_bytes(1, H, jnp.float32)
               + _padded_vmem_bytes(O, H, cdt)
               + _padded_vmem_bytes(O, 1, jnp.float32)))   # resident weights/biases
    vmem_limit = int(min(56 * 1024 * 1024,
                         max(4 * 1024 * 1024, int(1.5 * vmem_needed))))

    out_t = pl.pallas_call(
        _q_mlp_kernel,
        out_shape=jax.ShapeDtypeStruct((O, B), jnp.float32),
        grid_spec=pltpu.PrefetchScalarGridSpec(
            num_scalar_prefetch=0,
            grid=(n_tiles,),
            in_specs=[
                pl.BlockSpec((tile, S), lambda i: (i, 0)),   # state tile over batch
                pl.BlockSpec((tile, A), lambda i: (i, 0)),   # action tile over batch
                pl.BlockSpec((S, H), lambda i: (0, 0)),      # W1[:S]  (resident)
                pl.BlockSpec((A, H), lambda i: (0, 0)),      # W1[S:]  (resident)
                pl.BlockSpec((1, H), lambda i: (0, 0)),      # b1      (resident)
                pl.BlockSpec((O, H), lambda i: (0, 0)),      # W2^T    (resident)
                pl.BlockSpec((O, 1), lambda i: (0, 0)),      # b2      (resident)
            ],
            out_specs=pl.BlockSpec((O, tile), lambda i: (0, i)),
        ),
        compiler_params=pltpu.CompilerParams(
            dimension_semantics=("parallel",),
            vmem_limit_bytes=vmem_limit),
    )(state, action, params["w1_s"], params["w1_a"], params["b1"],
      params["w2_t"], params["b2"])

    # (O, B) -> (B, O); for O == 1 the transpose is effectively a free reshape.
    return out_t.T


def sampled_q_network(state, action, weights, *, tile_b=2048,
                      compute_dtype=jnp.bfloat16):
    """Convenience one-shot API (prep + apply). Prefer prepare_params + apply."""
    params = prepare_params(weights, state.shape[1], compute_dtype=compute_dtype)
    return sampled_q_network_apply(params, state, action, tile_b=tile_b)


def _make_weights(key, state_dim, action_dim, hidden_dim, out_dim):
    """Deterministic synthetic parameters matching the module's shapes."""
    k1, k2, k3, k4 = jax.random.split(key, 4)
    in_dim = state_dim + action_dim
    return {
        "layer1_w": jax.random.normal(k1, (in_dim, hidden_dim), jnp.float32) * 0.1,
        "layer1_b": jax.random.normal(k2, (hidden_dim,), jnp.float32) * 0.1,
        "output_w": jax.random.normal(k3, (hidden_dim, out_dim), jnp.float32) * 0.1,
        "output_b": jax.random.normal(k4, (out_dim,), jnp.float32) * 0.1,
    }


if __name__ == "__main__":
    key = jax.random.PRNGKey(0)
    k_s, k_a, k_w = jax.random.split(key, 3)

    B, STATE_DIM, ACTION_DIM, HIDDEN, OUT = 8, 12, 4, 32, 1
    state = jax.random.normal(k_s, (B, STATE_DIM), jnp.float32)
    action = jax.random.normal(k_a, (B, ACTION_DIM), jnp.float32)
    weights = _make_weights(k_w, STATE_DIM, ACTION_DIM, HIDDEN, OUT)

    # One-time weight prep (hoisted out of the hot path), jitted apply.
    params = prepare_params(weights, STATE_DIM)
    apply_fn = jax.jit(functools.partial(sampled_q_network_apply))

    out = apply_fn(params, state, action)
    out = jax.block_until_ready(out)
    assert out.shape == (B, OUT), out.shape

    # Reference 1: pure f32 forward (loose check — kernel uses bf16 MXU inputs).
    x = jnp.concatenate([state, action], axis=-1)
    z1_f32 = jnp.maximum(x @ weights["layer1_w"] + weights["layer1_b"], 0.0)
    ref_f32 = z1_f32 @ weights["output_w"] + weights["output_b"]
    assert jnp.allclose(out, ref_f32, atol=1e-1, rtol=1e-1), (
        float(jnp.max(jnp.abs(out - ref_f32))))

    # Reference 2: mimic the kernel's bf16 casts exactly (tight check).
    bf, f32 = jnp.bfloat16, jnp.float32
    xb = jnp.concatenate([state.astype(bf).astype(f32),
                          action.astype(bf).astype(f32)], axis=-1)
    w1b = weights["layer1_w"].astype(bf).astype(f32)
    w2b = weights["output_w"].astype(bf).astype(f32)
    z1 = jnp.maximum(xb @ w1b + weights["layer1_b"], 0.0)
    ref_bf = z1.astype(bf).astype(f32) @ w2b + weights["output_b"]
    assert jnp.allclose(out, ref_bf, atol=5e-3, rtol=5e-3), (
        float(jnp.max(jnp.abs(out - ref_bf))))

    print("KERNEL_OK")
</pallas_src>

<mosaic_0001>
module attributes {stable_mosaic.version = 11 : i64} {
  func.func @_q_mlp_kernel(%arg0: i32, %arg1: memref<8x12xf32, #tpu.memory_space<vmem>>, %arg2: memref<8x4xf32, #tpu.memory_space<vmem>>, %arg3: memref<12x32xbf16, #tpu.memory_space<vmem>>, %arg4: memref<4x32xbf16, #tpu.memory_space<vmem>>, %arg5: memref<1x32xf32, #tpu.memory_space<vmem>>, %arg6: memref<1x32xbf16, #tpu.memory_space<vmem>>, %arg7: memref<1x1xf32, #tpu.memory_space<vmem>>, %arg8: memref<1x8xf32, #tpu.memory_space<vmem>>) attributes {dimension_semantics = [#tpu.dimension_semantics<parallel>], iteration_bounds = array<i64: 1>, scalar_prefetch = 0 : i64, scratch_operands = 0 : i64, tpu.core_type = #tpu.core_type<tc>, window_params = [{transform_indices = @transform_0, window_bounds = array<i64: 8, 12>}, {transform_indices = @transform_1, window_bounds = array<i64: 8, 4>}, {pipeline_mode = #tpu.pipeline_mode<synchronous>, transform_indices = @transform_2, window_bounds = array<i64: 12, 32>}, {pipeline_mode = #tpu.pipeline_mode<synchronous>, transform_indices = @transform_3, window_bounds = array<i64: 4, 32>}, {pipeline_mode = #tpu.pipeline_mode<synchronous>, transform_indices = @transform_4, window_bounds = array<i64: 1, 32>}, {pipeline_mode = #tpu.pipeline_mode<synchronous>, transform_indices = @transform_5, window_bounds = array<i64: 1, 32>}, {pipeline_mode = #tpu.pipeline_mode<synchronous>, transform_indices = @transform_6, window_bounds = array<i64: 1, 1>}, {transform_indices = @transform_7, window_bounds = array<i64: 1, 8>}]} {
    %c0 = arith.constant 0 : index
    %c0_0 = arith.constant 0 : index
    %0 = vector.load %arg1[%c0, %c0_0] : memref<8x12xf32, #tpu.memory_space<vmem>>, vector<8x12xf32>
    %1 = arith.truncf %0 : vector<8x12xf32> to vector<8x12xbf16>
    %c0_1 = arith.constant 0 : index
    %c0_2 = arith.constant 0 : index
    %2 = vector.load %arg2[%c0_1, %c0_2] : memref<8x4xf32, #tpu.memory_space<vmem>>, vector<8x4xf32>
    %3 = arith.truncf %2 : vector<8x4xf32> to vector<8x4xbf16>
    %c0_3 = arith.constant 0 : index
    %c0_4 = arith.constant 0 : index
    %4 = vector.load %arg3[%c0_3, %c0_4] : memref<12x32xbf16, #tpu.memory_space<vmem>>, vector<12x32xbf16>
    %cst = arith.constant dense<0.000000e+00> : vector<8x32xf32>
    %5 = tpu.matmul %1, %4, %cst {dimension_numbers = #tpu.dot_dimension_numbers<[1], [0], [0], [1], [0, 0, 1, 1], [], []>} : vector<8x12xbf16>, vector<12x32xbf16>, vector<8x32xf32> -> vector<8x32xf32>
    %c0_5 = arith.constant 0 : index
    %c0_6 = arith.constant 0 : index
    %6 = vector.load %arg4[%c0_5, %c0_6] : memref<4x32xbf16, #tpu.memory_space<vmem>>, vector<4x32xbf16>
    %cst_7 = arith.constant dense<0.000000e+00> : vector<8x32xf32>
    %7 = tpu.matmul %3, %6, %cst_7 {dimension_numbers = #tpu.dot_dimension_numbers<[1], [0], [0], [1], [0, 0, 1, 1], [], []>} : vector<8x4xbf16>, vector<4x32xbf16>, vector<8x32xf32> -> vector<8x32xf32>
    %8 = arith.addf %5, %7 : vector<8x32xf32>
    %c0_8 = arith.constant 0 : index
    %c0_9 = arith.constant 0 : index
    %9 = vector.load %arg5[%c0_8, %c0_9] : memref<1x32xf32, #tpu.memory_space<vmem>>, vector<1x32xf32>
    %10 = vector.broadcast %9 : vector<1x32xf32> to vector<8x32xf32>
    %11 = arith.addf %8, %10 : vector<8x32xf32>
    %cst_10 = arith.constant 0.000000e+00 : f32
    %12 = vector.broadcast %cst_10 : f32 to vector<8x32xf32>
    %13 = arith.maximumf %11, %12 : vector<8x32xf32>
    %c0_11 = arith.constant 0 : index
    %c0_12 = arith.constant 0 : index
    %14 = vector.load %arg6[%c0_11, %c0_12] : memref<1x32xbf16, #tpu.memory_space<vmem>>, vector<1x32xbf16>
    %15 = arith.truncf %13 : vector<8x32xf32> to vector<8x32xbf16>
    %cst_13 = arith.constant dense<0.000000e+00> : vector<1x8xf32>
    %16 = tpu.matmul %14, %15, %cst_13 {dimension_numbers = #tpu.dot_dimension_numbers<[1], [1], [0], [0], [0, 0, 1, 0], [], []>} : vector<1x32xbf16>, vector<8x32xbf16>, vector<1x8xf32> -> vector<1x8xf32>
    %c0_14 = arith.constant 0 : index
    %c0_15 = arith.constant 0 : index
    %17 = vector.load %arg7[%c0_14, %c0_15] : memref<1x1xf32, #tpu.memory_space<vmem>>, vector<1x1xf32>
    %18 = vector.broadcast %17 : vector<1x1xf32> to vector<1x8xf32>
    %19 = arith.addf %16, %18 : vector<1x8xf32>
    %c0_16 = arith.constant 0 : index
    %c0_17 = arith.constant 0 : index
    %20 = vector.load %arg8[%c0_16, %c0_17] : memref<1x8xf32, #tpu.memory_space<vmem>>, vector<1x8xf32>
    tpu.vector_store %arg8[%c0_16, %c0_17], %19 {strides = array<i32>} : memref<1x8xf32, #tpu.memory_space<vmem>>, vector<1x8xf32>,
    return
  }
  func.func @transform_0(%arg0: i32) -> (i32, i32) {
    %c0_i32 = arith.constant 0 : i32
    %c0_i32_0 = arith.constant 0 : i32
    return %arg0, %c0_i32 : i32, i32
  }
  func.func @transform_1(%arg0: i32) -> (i32, i32) {
    %c0_i32 = arith.constant 0 : i32
    %c0_i32_0 = arith.constant 0 : i32
    return %arg0, %c0_i32 : i32, i32
  }
  func.func @transform_2(%arg0: i32) -> (i32, i32) {
    %c0_i32 = arith.constant 0 : i32
    %c0_i32_0 = arith.constant 0 : i32
    %c0_i32_1 = arith.constant 0 : i32
    return %c0_i32, %c0_i32_0 : i32, i32
  }
  func.func @transform_3(%arg0: i32) -> (i32, i32) {
    %c0_i32 = arith.constant 0 : i32
    %c0_i32_0 = arith.constant 0 : i32
    %c0_i32_1 = arith.constant 0 : i32
    return %c0_i32, %c0_i32_0 : i32, i32
  }
  func.func @transform_4(%arg0: i32) -> (i32, i32) {
    %c0_i32 = arith.constant 0 : i32
    %c0_i32_0 = arith.constant 0 : i32
    %c0_i32_1 = arith.constant 0 : i32
    return %c0_i32, %c0_i32_0 : i32, i32
  }
  func.func @transform_5(%arg0: i32) -> (i32, i32) {
    %c0_i32 = arith.constant 0 : i32
    %c0_i32_0 = arith.constant 0 : i32
    %c0_i32_1 = arith.constant 0 : i32
    return %c0_i32, %c0_i32_0 : i32, i32
  }
  func.func @transform_6(%arg0: i32) -> (i32, i32) {
    %c0_i32 = arith.constant 0 : i32
    %c0_i32_0 = arith.constant 0 : i32
    %c0_i32_1 = arith.constant 0 : i32
    return %c0_i32, %c0_i32_0 : i32, i32
  }
  func.func @transform_7(%arg0: i32) -> (i32, i32) {
    %c0_i32 = arith.constant 0 : i32
    %c0_i32_0 = arith.constant 0 : i32
    return %c0_i32, %arg0 : i32, i32
  }
}

</mosaic_0001>

<llo_original>
// kernel: sampled_q_network_apply.1
$region0: #{sampled_q_network_apply.1}
  #allocation0 [shape = 'u32[]', space=smem, size = 0x4, offset = 0x4, fixed_abs, tag = 'smem constant byte address 0x4 - core index']
  #allocation1 [shape = 'u32[144,128]{1,0:T(1,128)}', space=vmem, size = 0x12000, scoped, tag = 'internal scratch']
  #allocation2 [shape = 'f32[1,1]{1,0:T(1,128)S(1)}', space=vmem, size = 0x200, scoped, tag = 'scoped memory for sampled_q_network_apply.1']
  %s0 = inlined_call_operand.vmem [shape: f32[8,12], index: 0, kind: input, shape index: {}]
  %s1 = inlined_call_operand.vmem [shape: f32[8,4], index: 1, kind: input, shape index: {}]
  %s2 = inlined_call_operand.vmem [shape: bf16[12,32], index: 2, kind: input, shape index: {}]
  %s3 = inlined_call_operand.vmem [shape: bf16[4,32], index: 3, kind: input, shape index: {}]
  %s4 = inlined_call_operand.vmem [shape: f32[1,32], index: 4, kind: input, shape index: {}]
  %s5 = inlined_call_operand.vmem [shape: bf16[1,32], index: 5, kind: input, shape index: {}]
  %s6 = inlined_call_operand.<no memory space> [shape: f32[1,1], index: 6, kind: input, shape index: {}]
  %s7 = inlined_call_operand.hbm [shape: f32[1,8], index: 7, kind: output, shape index: {}]
  %s8 = sld [smem:[#allocation0]]
  $region38: #{sampled_q_network_apply.1} parent=0
    _
  %s10 = ssub.s32 1, %s8
  %s11 = scalar_select 0, %s10, %s8
  %v12 = vstv %s6
  %13 = vst [vmem:[#allocation2] sm:$0x1] %v12
  $region1: #{sampled_q_network_apply.1} parent=0
    #allocation3 [shape = 'u8[512]{0}', space=vmem, size = 0x400, scoped, tag = 'output window, operand 0, single buffered']
    #allocation4 [shape = 's32[1]{0}', space=sflag, size = 0x4, scoped, tag = 'scoped memory for sampled_q_network_apply.1']
    %14 = vsyncpa [#allocation4], 0
    // Predicated region
    $region2: #{sampled_q_network_apply.1} parent=1 // pred_check
      _
    $region3: #{sampled_q_network_apply.1} parent=1 // pred_check_branch
      %16 = sbr.rel (0) target = $region5
    $region4: #{sampled_q_network_apply.1} parent=1 // pred_region
      _
    $region5: #{sampled_q_network_apply.1} parent=1 // pred_fallthru
      _
    // Predicated region
    $region6: #{sampled_q_network_apply.1} parent=1 // pred_check
      _
    $region7: #{sampled_q_network_apply.1} parent=1 // pred_check_branch
      %18 = sbr.rel (0) target = $region9
    $region8: #{sampled_q_network_apply.1} parent=1 // pred_region
      _
    $region9: #{sampled_q_network_apply.1} parent=1 // pred_fallthru
      _
    // Predicated region
    $region10: #{sampled_q_network_apply.1} parent=1 // pred_check
      _
    $region11: #{sampled_q_network_apply.1} parent=1 // pred_check_branch
      %20 = sbr.rel (0) target = $region13
    $region12: #{sampled_q_network_apply.1} parent=1 // pred_region
      _
    $region13: #{sampled_q_network_apply.1} parent=1 // pred_fallthru
      _
    // Predicated region
    $region14: #{sampled_q_network_apply.1} parent=1 // pred_check
      _
    $region15: #{sampled_q_network_apply.1} parent=1 // pred_check_branch
      %22 = sbr.rel (0) target = $region17
    $region16: #{sampled_q_network_apply.1} parent=1 // pred_region
      _
    $region17: #{sampled_q_network_apply.1} parent=1 // pred_fallthru
      _
    // Predicated region
    $region18: #{sampled_q_network_apply.1} parent=1 // pred_check
      _
    $region19: #{sampled_q_network_apply.1} parent=1 // pred_check_branch
      %24 = sbr.rel (0) target = $region21
    $region20: #{sampled_q_network_apply.1} parent=1 // pred_region
      _
    $region21: #{sampled_q_network_apply.1} parent=1 // pred_fallthru
      _
    // Predicated region
    $region22: #{sampled_q_network_apply.1} parent=1 // pred_check
      _
    $region23: #{sampled_q_network_apply.1} parent=1 // pred_check_branch
      %26 = sbr.rel (0) target = $region25
    $region24: #{sampled_q_network_apply.1} parent=1 // pred_region
      _
    $region25: #{sampled_q_network_apply.1} parent=1 // pred_fallthru
      _
    // Predicated region
    $region26: #{sampled_q_network_apply.1} parent=1 // pred_check
      _
    $region27: #{sampled_q_network_apply.1} parent=1 // pred_check_branch
      %28 = sbr.rel (0) target = $region29
    $region28: #{sampled_q_network_apply.1} parent=1 // pred_region
      _
    $region29: #{sampled_q_network_apply.1} parent=1 // pred_fallthru
      _
    %v30 = vld [vmem:[%s0] sm:$0xff]
    %v31 = vpack.c.bf16 %v30, %v30
    %v32 = vld [vmem:[%s1] sm:$0xff]
    %v33 = vpack.c.bf16 %v32, %v32
    %v34 = vld [vmem:[%s2] sm:$0xf]
    %v35 = vld [vmem:[%s2 + $0x4] sm:$0x3]
    %v36 = vld [vmem:[%s3] sm:$0x3]
    %vm37 = vcmask 31744
    %v39 = vsel %vm37, %v33, 0
    %vm41 = vcmask 1041408
    %v43 = vsel %vm41, %v36, 0
    %45 = vmatprep.subr.bf16.mxu0 0
    %46 = vmatpush1.bf16.msra.mxu0 %v43
    %47 = vmatprep.subr.bf16.mxu0 0
    %48 = vmatpush1.bf16.msra.mxu0 0
    %49 = vmatprep.subr.bf16.mxu0 0
    %50 = vmatpush1.bf16.msra.mxu0 0
    %51 = vmatprep.subr.bf16.mxu0 0
    %52 = vmatpush1.bf16.msra.mxu0 0
    %53 = vmatprep.subr.bf16.mxu0 0
    %54 = vmatpush1.bf16.msra.mxu0 0
    %55 = vmatprep.subr.bf16.mxu0 0
    %56 = vmatpush1.bf16.msra.mxu0 0
    %57 = vmatprep.subr.bf16.mxu0 0
    %58 = vmatpush1.bf16.msra.mxu0 0
    %59 = vmatprep.subr.bf16.mxu0 0
    %60 = vmatpush1.bf16.msra.mxu0 0
    %61 = vmatprep.subr.bf16.mxu0 0
    %62 = vmatpush1.bf16.msra.mxu0 0
    %63 = vmatprep.subr.bf16.mxu0 0
    %64 = vmatpush1.bf16.msra.mxu0 0
    %65 = vmatprep.subr.bf16.mxu0 0
    %66 = vmatpush1.bf16.msra.mxu0 0
    %67 = vmatprep.subr.bf16.mxu0 0
    %68 = vmatpush1.bf16.msra.mxu0 0
    %69 = vmatprep.subr.bf16.mxu0 0
    %70 = vmatpush1.bf16.msra.mxu0 0
    %71 = vmatprep.subr.bf16.mxu0 0
    %72 = vmatpush1.bf16.msra.mxu0 0
    %73 = vmatprep.subr.bf16.mxu0 0
    %74 = vmatpush1.bf16.msra.mxu0 0
    %75 = vmatprep.subr.bf16.mxu0 0
    %76 = vmatpush1.bf16.msra.mxu0 0
    %77 = vmatprep.mubr.bf16.mxu0 0
    %78 = vmatmul.mubr.bf16.gmra.mrb[0].mxu0 %v39
    %v79 = vpop.f32.mrb[0].mxu0
    %v80 = vadd.f32 0.0, %v79
    %v81 = vpop.f32.mrb[0].mxu0
    %v82 = vpop.f32.mrb[0].mxu0
    %v83 = vpop.f32.mrb[0].mxu0
    %84 = vdwg.mxu0
    %v87 = vunpack.c.l.b16 %v34
    %v88 = vunpack.c.l.b16 %v35
    %v89 = vpack.c.b16 %v88, %v87
    %vm90 = vcmask 97280
    %v92 = vsel %vm90, %v31, 0
    %vm94 = vcmask 1045504
    %v96 = vsel %vm94, %v89, 0
    %98 = vmatprep.subr.bf16.mxu0 0
    %99 = vmatpush1.bf16.msra.mxu0 %v96
    %100 = vmatprep.subr.bf16.mxu0 0
    %101 = vmatpush1.bf16.msra.mxu0 0
    %102 = vmatprep.subr.bf16.mxu0 0
    %103 = vmatpush1.bf16.msra.mxu0 0
    %104 = vmatprep.subr.bf16.mxu0 0
    %105 = vmatpush1.bf16.msra.mxu0 0
    %106 = vmatprep.subr.bf16.mxu0 0
    %107 = vmatpush1.bf16.msra.mxu0 0
    %108 = vmatprep.subr.bf16.mxu0 0
    %109 = vmatpush1.bf16.msra.mxu0 0
    %110 = vmatprep.subr.bf16.mxu0 0
    %111 = vmatpush1.bf16.msra.mxu0 0
    %112 = vmatprep.subr.bf16.mxu0 0
    %113 = vmatpush1.bf16.msra.mxu0 0
    %114 = vmatprep.subr.bf16.mxu0 0
    %115 = vmatpush1.bf16.msra.mxu0 0
    %116 = vmatprep.subr.bf16.mxu0 0
    %117 = vmatpush1.bf16.msra.mxu0 0
    %118 = vmatprep.subr.bf16.mxu0 0
    %119 = vmatpush1.bf16.msra.mxu0 0
    %120 = vmatprep.subr.bf16.mxu0 0
    %121 = vmatpush1.bf16.msra.mxu0 0
    %122 = vmatprep.subr.bf16.mxu0 0
    %123 = vmatpush1.bf16.msra.mxu0 0
    %124 = vmatprep.subr.bf16.mxu0 0
    %125 = vmatpush1.bf16.msra.mxu0 0
    %126 = vmatprep.subr.bf16.mxu0 0
    %127 = vmatpush1.bf16.msra.mxu0 0
    %128 = vmatprep.subr.bf16.mxu0 0
    %129 = vmatpush1.bf16.msra.mxu0 0
    %130 = vmatprep.mubr.bf16.mxu0 0
    %131 = vmatmul.mubr.bf16.gmra.mrb[0].mxu0 %v92
    %v132 = vpop.f32.mrb[0].mxu0
    %v133 = vadd.f32 %v80, %v132
    %v134 = vpop.f32.mrb[0].mxu0
    %v135 = vpop.f32.mrb[0].mxu0
    %v136 = vpop.f32.mrb[0].mxu0
    %137 = vdwg.mxu0
    %v138 = vld [vmem:[%s4] sm:$0x1]
    %v140 = vlaneseq
    %v141 = vshrl.u32 %v140, 7
    %v142 = vsub.s32 0, %v141
    %v143 = vrot.slane %v138, %v142
    %v145 = vadd.f32 %v133, %v143
    %v146 = vmax.f32 %v145, 0.0
    %v147 = vld [vmem:[%s5] sm:$0x1]
    %v148 = vpack.c.bf16 %v146, %v146
    %v149 = vld [vmem:[#allocation2] sm:$0x1]
    %151 = vset.pattern.permute.xlu0 0
    %152 = vperm.xlu0 %151, %v149
    %v153 = vpop.permute.xlu0 %152
    %v155 = vlaneseq
    %v156 = vshrl.u32 %v155, 7
    %v157 = vsub.s32 0, %v156
    %v158 = vrot.slane %v153, %v157
    %vm159 = vcmask 261120
    %v161 = vsel %vm159, %v147, 0
    %v164 = vsel %vm159, %v148, 0
    %166 = vmatprep.subr.bf16.mxu0 0
    %167 = vmatpush1.bf16.xpose.msra.mxu0 %v164
    %168 = vmatprep.subr.bf16.mxu0 0
    %169 = vmatpush1.bf16.xpose.msra.mxu0 0
    %170 = vmatprep.subr.bf16.mxu0 0
    %171 = vmatpush1.bf16.xpose.msra.mxu0 0
    %172 = vmatprep.subr.bf16.mxu0 0
    %173 = vmatpush1.bf16.xpose.msra.mxu0 0
    %174 = vmatprep.subr.bf16.mxu0 0
    %175 = vmatpush1.bf16.xpose.msra.mxu0 0
    %176 = vmatprep.subr.bf16.mxu0 0
    %177 = vmatpush1.bf16.xpose.msra.mxu0 0
    %178 = vmatprep.subr.bf16.mxu0 0
    %179 = vmatpush1.bf16.xpose.msra.mxu0 0
    %180 = vmatprep.subr.bf16.mxu0 0
    %181 = vmatpush1.bf16.xpose.msra.mxu0 0
    %182 = vmatprep.subr.bf16.mxu0 0
    %183 = vmatpush1.bf16.xpose.msra.mxu0 0
    %184 = vmatprep.subr.bf16.mxu0 0
    %185 = vmatpush1.bf16.xpose.msra.mxu0 0
    %186 = vmatprep.subr.bf16.mxu0 0
    %187 = vmatpush1.bf16.xpose.msra.mxu0 0
    %188 = vmatprep.subr.bf16.mxu0 0
    %189 = vmatpush1.bf16.xpose.msra.mxu0 0
    %190 = vmatprep.subr.bf16.mxu0 0
    %191 = vmatpush1.bf16.xpose.msra.mxu0 0
    %192 = vmatprep.subr.bf16.mxu0 0
    %193 = vmatpush1.bf16.xpose.msra.mxu0 0
    %194 = vmatprep.subr.bf16.mxu0 0
    %195 = vmatpush1.bf16.xpose.msra.mxu0 0
    %196 = vmatprep.subr.bf16.mxu0 0
    %197 = vmatpush1.bf16.xpose.msra.mxu0 0
    %198 = vmatprep.mubr.bf16.mxu0 0
    %199 = vmatmul.mubr.bf16.gmra.mrb[0].mxu0 %v161
    %v200 = vpop.f32.mrb[0].mxu0
    %v201 = vadd.f32 %v158, %v200
    %v202 = vpop.f32.mrb[0].mxu0
    %v203 = vpop.f32.mrb[0].mxu0
    %v204 = vpop.f32.mrb[0].mxu0
    %205 = vdwg.mxu0
    %vm206 = vcmask 57344
    %207 = vst.msk [vmem:[#allocation3] sm:$0x1] %vm206, %v201
    // Predicated region
    $region30: #{sampled_q_network_apply.1} parent=1 // pred_check
      _
    $region31: #{sampled_q_network_apply.1} parent=1 // pred_check_branch
      %209 = sbr.rel (0) target = $region33
    $region32: #{sampled_q_network_apply.1} parent=1 // pred_region
      %s211 = ssub.s32 16, 16
      %212 = vsyncadd [#allocation4], %s211
      %s214 = sshll.u32 [#allocation3], 4
      %s215 = int_to_ptr.vmem [resolvable:$true] %s214
      %217 = dma.vmem_to_hbm [thread:$0]  %s215, 16, %s7, [#allocation4]
    $region33: #{sampled_q_network_apply.1} parent=1 // pred_fallthru
      _
    // Predicated region
    $region34: #{sampled_q_network_apply.1} parent=1 // pred_check
      _
    $region35: #{sampled_q_network_apply.1} parent=1 // pred_check_branch
      %219 = sbr.rel (0) target = $region37
    $region36: #{sampled_q_network_apply.1} parent=1 // pred_region
      %220 = dma.done [#allocation4], 16
    $region37: #{sampled_q_network_apply.1} parent=1 // pred_fallthru
      _
    %221 = vsyncpa [#allocation4], 1

</llo_original>
